<compile_context>
chip_gen: v7x
topology: tpu7x:2x2x1
jax: 0.10.0
libtpu: 0.0.40
codegen_flags: <defaults>
</compile_context>

<pallas_src>
import jax
import jax.numpy as jnp
from jax.experimental import pallas as pl
from jax.experimental.pallas import tpu as pltpu


def _round_up(n, m):
    return ((n + m - 1) // m) * m


def mlp_kernel(alpha_ref,               # SMEM (3,)   f32 PReLU params
               x_ref,                   # VMEM (TB, Din)  bf16
               w1_ref, b1_ref,          # VMEM (Din, Dout) bf16, (1, Dout) f32
               w2_ref, b2_ref,          # VMEM (Dout, Dout) bf16, (1, Dout) f32
               w3_ref, b3_ref,          # VMEM (Dout, Dout) bf16, (1, Dout) f32
               ws_ref, bs_ref,          # VMEM (Din, Dout) bf16, (1, Dout) f32
               o_ref):                  # VMEM (TB, Dout) f32
    x = x_ref[...]                                        # bf16 MXU operand

    # Shortcut first: keeps only one extra f32 tile live until the final add.
    s = jnp.dot(x, ws_ref[...], preferred_element_type=jnp.float32) + bs_ref[...]

    # fcs: Linear -> PReLU -> Linear -> PReLU -> Linear -> PReLU
    h = jnp.dot(x, w1_ref[...], preferred_element_type=jnp.float32) + b1_ref[...]
    h = jnp.where(h > 0, h, alpha_ref[0] * h)
    h = jnp.dot(h.astype(jnp.bfloat16), w2_ref[...],
                preferred_element_type=jnp.float32) + b2_ref[...]
    h = jnp.where(h > 0, h, alpha_ref[1] * h)
    h = jnp.dot(h.astype(jnp.bfloat16), w3_ref[...],
                preferred_element_type=jnp.float32) + b3_ref[...]
    h = jnp.where(h > 0, h, alpha_ref[2] * h)

    o_ref[...] = (h + s).astype(o_ref.dtype)


def mlp_forward(x, params, *, block_b=256):
    """x: (B, in_dim) float32; params: dict (weights stored (fan_in, fan_out))."""
    B, in_dim = x.shape
    out_dim = params["w1"].shape[1]

    # Lane-dense padding of feature dims; batch padded to the batch tile.
    d_in = _round_up(in_dim, 128)
    d_out = _round_up(out_dim, 128)
    tb = min(block_b, _round_up(B, 8))
    b_pad = _round_up(B, tb)
    nb = b_pad // tb

    # ---- pad + cast operands in the wrapper (outside the kernel) ----
    xp = jnp.zeros((b_pad, d_in), jnp.bfloat16)
    xp = xp.at[:B, :in_dim].set(x.astype(jnp.bfloat16))

    def pad_w(w):
        fi, fo = w.shape
        wp = jnp.zeros((_round_up(fi, 128), d_out), jnp.bfloat16)
        return wp.at[:fi, :fo].set(w.astype(jnp.bfloat16))

    def pad_b(b):
        return jnp.zeros((1, d_out), jnp.float32).at[:, :out_dim].set(
            b.astype(jnp.float32))

    w1, b1 = pad_w(params["w1"]), pad_b(params["b1"])
    w2, b2 = pad_w(params["w2"]), pad_b(params["b2"])
    w3, b3 = pad_w(params["w3"]), pad_b(params["b3"])
    ws, bs = pad_w(params["ws"]), pad_b(params["bs"])
    alphas = params["alphas"].astype(jnp.float32)

    def const(shape):
        return pl.BlockSpec(shape, lambda i: (0, 0))      # resident across grid

    flops = 2 * b_pad * (2 * d_in * d_out + 2 * d_out * d_out)
    bytes_accessed = (
        xp.size * 2
        + (w1.size + w2.size + w3.size + ws.size) * 2
        + (b1.size + b2.size + b3.size + bs.size) * 4
        + b_pad * d_out * 4
    )

    out = pl.pallas_call(
        mlp_kernel,
        out_shape=jax.ShapeDtypeStruct((b_pad, d_out), jnp.float32),
        grid=(nb,),
        in_specs=[
            pl.BlockSpec(memory_space=pltpu.SMEM),          # alphas (scalars)
            pl.BlockSpec((tb, d_in), lambda i: (i, 0)),     # x tile (pipelined)
            const((d_in, d_out)), const((1, d_out)),        # w1, b1
            const((d_out, d_out)), const((1, d_out)),       # w2, b2
            const((d_out, d_out)), const((1, d_out)),       # w3, b3
            const((d_in, d_out)), const((1, d_out)),        # ws, bs
        ],
        out_specs=pl.BlockSpec((tb, d_out), lambda i: (i, 0)),
        compiler_params=pltpu.CompilerParams(
            dimension_semantics=("parallel",)),
        cost_estimate=pl.CostEstimate(
            flops=flops, transcendentals=0, bytes_accessed=bytes_accessed),
    )(alphas, xp, w1, b1, w2, b2, w3, b3, ws, bs)

    return out[:B, :out_dim]


def init_params(key, in_dim, out_dim):
    """Mimic PyTorch nn.Linear default init (U[-1/sqrt(fan_in), +])."""
    keys = jax.random.split(key, 8)

    def linear(kw, kb, fan_in, fan_out):
        bound = 1.0 / jnp.sqrt(fan_in)
        # stored as (fan_in, fan_out) so the kernel computes x @ W
        w = jax.random.uniform(kw, (fan_in, fan_out), jnp.float32, -bound, bound)
        b = jax.random.uniform(kb, (1, fan_out), jnp.float32, -bound, bound)
        return w, b

    w1, b1 = linear(keys[0], keys[1], in_dim, out_dim)
    w2, b2 = linear(keys[2], keys[3], out_dim, out_dim)
    w3, b3 = linear(keys[4], keys[5], out_dim, out_dim)
    ws, bs = linear(keys[6], keys[7], in_dim, out_dim)
    alphas = jnp.full((3,), 0.25, jnp.float32)   # PReLU default (num_parameters=1)

    return dict(w1=w1, b1=b1, w2=w2, b2=b2, w3=w3, b3=b3, ws=ws, bs=bs,
                alphas=alphas)


def mlp_reference(x, p):
    """Pure-JAX reference mirroring the kernel's bf16-operand / f32-accum math."""
    bf = jnp.bfloat16

    def prelu(v, a):
        return jnp.where(v > 0, v, a * v)

    xb = x.astype(bf)
    h = prelu(jnp.dot(xb, p["w1"].astype(bf),
                      preferred_element_type=jnp.float32) + p["b1"], p["alphas"][0])
    h = prelu(jnp.dot(h.astype(bf), p["w2"].astype(bf),
                      preferred_element_type=jnp.float32) + p["b2"], p["alphas"][1])
    h = prelu(jnp.dot(h.astype(bf), p["w3"].astype(bf),
                      preferred_element_type=jnp.float32) + p["b3"], p["alphas"][2])
    s = jnp.dot(xb, p["ws"].astype(bf),
                preferred_element_type=jnp.float32) + p["bs"]
    return h + s


if __name__ == "__main__":
    B, in_dim, out_dim = 8, 32, 32
    key = jax.random.PRNGKey(0)
    kx, kp = jax.random.split(key)

    x = jax.random.normal(kx, (B, in_dim), jnp.float32)
    params = init_params(kp, in_dim, out_dim)

    out = jax.block_until_ready(mlp_forward(x, params))
    ref = mlp_reference(x, params)

    assert out.shape == (B, out_dim)
    max_diff = jnp.max(jnp.abs(out - ref))
    assert jnp.allclose(out, ref, atol=5e-3, rtol=5e-3), \
        f"mismatch vs reference, max abs diff = {max_diff}"

    print("KERNEL_OK")
</pallas_src>

<mosaic_0001>
module attributes {stable_mosaic.version = 11 : i64} {
  func.func @mlp_kernel(%arg0: i32, %arg1: memref<3xf32, #tpu.memory_space<smem>>, %arg2: memref<8x128xbf16, #tpu.memory_space<vmem>>, %arg3: memref<128x128xbf16, #tpu.memory_space<vmem>>, %arg4: memref<1x128xf32, #tpu.memory_space<vmem>>, %arg5: memref<128x128xbf16, #tpu.memory_space<vmem>>, %arg6: memref<1x128xf32, #tpu.memory_space<vmem>>, %arg7: memref<128x128xbf16, #tpu.memory_space<vmem>>, %arg8: memref<1x128xf32, #tpu.memory_space<vmem>>, %arg9: memref<128x128xbf16, #tpu.memory_space<vmem>>, %arg10: memref<1x128xf32, #tpu.memory_space<vmem>>, %arg11: memref<8x128xf32, #tpu.memory_space<vmem>>) attributes {dimension_semantics = [#tpu.dimension_semantics<parallel>], iteration_bounds = array<i64: 1>, scalar_prefetch = 0 : i64, scratch_operands = 0 : i64, tpu.core_type = #tpu.core_type<tc>, window_params = [{transform_indices = @transform_0, window_bounds = array<i64: 3>}, {transform_indices = @transform_1, window_bounds = array<i64: 8, 128>}, {pipeline_mode = #tpu.pipeline_mode<synchronous>, transform_indices = @transform_2, window_bounds = array<i64: 128, 128>}, {pipeline_mode = #tpu.pipeline_mode<synchronous>, transform_indices = @transform_3, window_bounds = array<i64: 1, 128>}, {pipeline_mode = #tpu.pipeline_mode<synchronous>, transform_indices = @transform_4, window_bounds = array<i64: 128, 128>}, {pipeline_mode = #tpu.pipeline_mode<synchronous>, transform_indices = @transform_5, window_bounds = array<i64: 1, 128>}, {pipeline_mode = #tpu.pipeline_mode<synchronous>, transform_indices = @transform_6, window_bounds = array<i64: 128, 128>}, {pipeline_mode = #tpu.pipeline_mode<synchronous>, transform_indices = @transform_7, window_bounds = array<i64: 1, 128>}, {pipeline_mode = #tpu.pipeline_mode<synchronous>, transform_indices = @transform_8, window_bounds = array<i64: 128, 128>}, {pipeline_mode = #tpu.pipeline_mode<synchronous>, transform_indices = @transform_9, window_bounds = array<i64: 1, 128>}, {transform_indices = @transform_10, window_bounds = array<i64: 8, 128>}]} {
    %c0 = arith.constant 0 : index
    %c0_0 = arith.constant 0 : index
    %0 = vector.load %arg2[%c0, %c0_0] : memref<8x128xbf16, #tpu.memory_space<vmem>>, vector<8x128xbf16>
    %c0_1 = arith.constant 0 : index
    %c0_2 = arith.constant 0 : index
    %1 = vector.load %arg9[%c0_1, %c0_2] : memref<128x128xbf16, #tpu.memory_space<vmem>>, vector<128x128xbf16>
    %cst = arith.constant dense<0.000000e+00> : vector<8x128xf32>
    %2 = tpu.matmul %0, %1, %cst {dimension_numbers = #tpu.dot_dimension_numbers<[1], [0], [0], [1], [0, 0, 1, 1], [], []>} : vector<8x128xbf16>, vector<128x128xbf16>, vector<8x128xf32> -> vector<8x128xf32>
    %c0_3 = arith.constant 0 : index
    %c0_4 = arith.constant 0 : index
    %3 = vector.load %arg10[%c0_3, %c0_4] : memref<1x128xf32, #tpu.memory_space<vmem>>, vector<1x128xf32>
    %4 = vector.broadcast %3 : vector<1x128xf32> to vector<8x128xf32>
    %5 = arith.addf %2, %4 : vector<8x128xf32>
    %c0_5 = arith.constant 0 : index
    %c0_6 = arith.constant 0 : index
    %6 = vector.load %arg3[%c0_5, %c0_6] : memref<128x128xbf16, #tpu.memory_space<vmem>>, vector<128x128xbf16>
    %cst_7 = arith.constant dense<0.000000e+00> : vector<8x128xf32>
    %7 = tpu.matmul %0, %6, %cst_7 {dimension_numbers = #tpu.dot_dimension_numbers<[1], [0], [0], [1], [0, 0, 1, 1], [], []>} : vector<8x128xbf16>, vector<128x128xbf16>, vector<8x128xf32> -> vector<8x128xf32>
    %c0_8 = arith.constant 0 : index
    %c0_9 = arith.constant 0 : index
    %8 = vector.load %arg4[%c0_8, %c0_9] : memref<1x128xf32, #tpu.memory_space<vmem>>, vector<1x128xf32>
    %9 = vector.broadcast %8 : vector<1x128xf32> to vector<8x128xf32>
    %10 = arith.addf %7, %9 : vector<8x128xf32>
    %cst_10 = arith.constant 0.000000e+00 : f32
    %11 = vector.broadcast %cst_10 : f32 to vector<8x128xf32>
    %12 = arith.cmpf ogt, %10, %11 : vector<8x128xf32>
    %c0_11 = arith.constant 0 : index
    %13 = memref.load %arg1[%c0_11] : memref<3xf32, #tpu.memory_space<smem>>
    %14 = vector.broadcast %13 : f32 to vector<8x128xf32>
    %15 = arith.mulf %14, %10 : vector<8x128xf32>
    %16 = arith.select %12, %10, %15 : vector<8x128xi1>, vector<8x128xf32>
    %17 = arith.truncf %16 : vector<8x128xf32> to vector<8x128xbf16>
    %c0_12 = arith.constant 0 : index
    %c0_13 = arith.constant 0 : index
    %18 = vector.load %arg5[%c0_12, %c0_13] : memref<128x128xbf16, #tpu.memory_space<vmem>>, vector<128x128xbf16>
    %cst_14 = arith.constant dense<0.000000e+00> : vector<8x128xf32>
    %19 = tpu.matmul %17, %18, %cst_14 {dimension_numbers = #tpu.dot_dimension_numbers<[1], [0], [0], [1], [0, 0, 1, 1], [], []>} : vector<8x128xbf16>, vector<128x128xbf16>, vector<8x128xf32> -> vector<8x128xf32>
    %c0_15 = arith.constant 0 : index
    %c0_16 = arith.constant 0 : index
    %20 = vector.load %arg6[%c0_15, %c0_16] : memref<1x128xf32, #tpu.memory_space<vmem>>, vector<1x128xf32>
    %21 = vector.broadcast %20 : vector<1x128xf32> to vector<8x128xf32>
    %22 = arith.addf %19, %21 : vector<8x128xf32>
    %cst_17 = arith.constant 0.000000e+00 : f32
    %23 = vector.broadcast %cst_17 : f32 to vector<8x128xf32>
    %24 = arith.cmpf ogt, %22, %23 : vector<8x128xf32>
    %c1 = arith.constant 1 : index
    %25 = memref.load %arg1[%c1] : memref<3xf32, #tpu.memory_space<smem>>
    %26 = vector.broadcast %25 : f32 to vector<8x128xf32>
    %27 = arith.mulf %26, %22 : vector<8x128xf32>
    %28 = arith.select %24, %22, %27 : vector<8x128xi1>, vector<8x128xf32>
    %29 = arith.truncf %28 : vector<8x128xf32> to vector<8x128xbf16>
    %c0_18 = arith.constant 0 : index
    %c0_19 = arith.constant 0 : index
    %30 = vector.load %arg7[%c0_18, %c0_19] : memref<128x128xbf16, #tpu.memory_space<vmem>>, vector<128x128xbf16>
    %cst_20 = arith.constant dense<0.000000e+00> : vector<8x128xf32>
    %31 = tpu.matmul %29, %30, %cst_20 {dimension_numbers = #tpu.dot_dimension_numbers<[1], [0], [0], [1], [0, 0, 1, 1], [], []>} : vector<8x128xbf16>, vector<128x128xbf16>, vector<8x128xf32> -> vector<8x128xf32>
    %c0_21 = arith.constant 0 : index
    %c0_22 = arith.constant 0 : index
    %32 = vector.load %arg8[%c0_21, %c0_22] : memref<1x128xf32, #tpu.memory_space<vmem>>, vector<1x128xf32>
    %33 = vector.broadcast %32 : vector<1x128xf32> to vector<8x128xf32>
    %34 = arith.addf %31, %33 : vector<8x128xf32>
    %cst_23 = arith.constant 0.000000e+00 : f32
    %35 = vector.broadcast %cst_23 : f32 to vector<8x128xf32>
    %36 = arith.cmpf ogt, %34, %35 : vector<8x128xf32>
    %c2 = arith.constant 2 : index
    %37 = memref.load %arg1[%c2] : memref<3xf32, #tpu.memory_space<smem>>
    %38 = vector.broadcast %37 : f32 to vector<8x128xf32>
    %39 = arith.mulf %38, %34 : vector<8x128xf32>
    %40 = arith.select %36, %34, %39 : vector<8x128xi1>, vector<8x128xf32>
    %41 = arith.addf %40, %5 : vector<8x128xf32>
    %c0_24 = arith.constant 0 : index
    %c0_25 = arith.constant 0 : index
    %42 = vector.load %arg11[%c0_24, %c0_25] : memref<8x128xf32, #tpu.memory_space<vmem>>, vector<8x128xf32>
    tpu.vector_store %arg11[%c0_24, %c0_25], %41 {strides = array<i32>} : memref<8x128xf32, #tpu.memory_space<vmem>>, vector<8x128xf32>,
    return
  }
  func.func @transform_0(%arg0: i32) -> i32 {
    %c0_i32 = arith.constant 0 : i32
    %c0_i32_0 = arith.constant 0 : i32
    return %c0_i32 : i32
  }
  func.func @transform_1(%arg0: i32) -> (i32, i32) {
    %c0_i32 = arith.constant 0 : i32
    %c0_i32_0 = arith.constant 0 : i32
    return %arg0, %c0_i32 : i32, i32
  }
  func.func @transform_2(%arg0: i32) -> (i32, i32) {
    %c0_i32 = arith.constant 0 : i32
    %c0_i32_0 = arith.constant 0 : i32
    %c0_i32_1 = arith.constant 0 : i32
    return %c0_i32, %c0_i32_0 : i32, i32
  }
  func.func @transform_3(%arg0: i32) -> (i32, i32) {
    %c0_i32 = arith.constant 0 : i32
    %c0_i32_0 = arith.constant 0 : i32
    %c0_i32_1 = arith.constant 0 : i32
    return %c0_i32, %c0_i32_0 : i32, i32
  }
  func.func @transform_4(%arg0: i32) -> (i32, i32) {
    %c0_i32 = arith.constant 0 : i32
    %c0_i32_0 = arith.constant 0 : i32
    %c0_i32_1 = arith.constant 0 : i32
    return %c0_i32, %c0_i32_0 : i32, i32
  }
  func.func @transform_5(%arg0: i32) -> (i32, i32) {
    %c0_i32 = arith.constant 0 : i32
    %c0_i32_0 = arith.constant 0 : i32
    %c0_i32_1 = arith.constant 0 : i32
    return %c0_i32, %c0_i32_0 : i32, i32
  }
  func.func @transform_6(%arg0: i32) -> (i32, i32) {
    %c0_i32 = arith.constant 0 : i32
    %c0_i32_0 = arith.constant 0 : i32
    %c0_i32_1 = arith.constant 0 : i32
    return %c0_i32, %c0_i32_0 : i32, i32
  }
  func.func @transform_7(%arg0: i32) -> (i32, i32) {
    %c0_i32 = arith.constant 0 : i32
    %c0_i32_0 = arith.constant 0 : i32
    %c0_i32_1 = arith.constant 0 : i32
    return %c0_i32, %c0_i32_0 : i32, i32
  }
  func.func @transform_8(%arg0: i32) -> (i32, i32) {
    %c0_i32 = arith.constant 0 : i32
    %c0_i32_0 = arith.constant 0 : i32
    %c0_i32_1 = arith.constant 0 : i32
    return %c0_i32, %c0_i32_0 : i32, i32
  }
  func.func @transform_9(%arg0: i32) -> (i32, i32) {
    %c0_i32 = arith.constant 0 : i32
    %c0_i32_0 = arith.constant 0 : i32
    %c0_i32_1 = arith.constant 0 : i32
    return %c0_i32, %c0_i32_0 : i32, i32
  }
  func.func @transform_10(%arg0: i32) -> (i32, i32) {
    %c0_i32 = arith.constant 0 : i32
    %c0_i32_0 = arith.constant 0 : i32
    return %arg0, %c0_i32 : i32, i32
  }
}

</mosaic_0001>

<llo_original>
// kernel: tpu_custom_call.1
$region0: #{tpu_custom_call.1}
  #allocation0 [shape = 'u32[]', space=smem, size = 0x4, offset = 0x4, fixed_abs, tag = 'smem constant byte address 0x4 - core index']
  #allocation1 [shape = 'u32[144,128]{1,0:T(1,128)}', space=vmem, size = 0x12000, scoped, tag = 'internal scratch']
  %s0 = inlined_call_operand.hbm [shape: f32[3], index: 0, kind: input, shape index: {}]
  %s1 = inlined_call_operand.hbm [shape: bf16[8,128], index: 1, kind: input, shape index: {}]
  %s2 = inlined_call_operand.hbm [shape: bf16[128,128], index: 2, kind: input, shape index: {}]
  %s3 = inlined_call_operand.vmem [shape: f32[1,128], index: 3, kind: input, shape index: {}]
  %s4 = inlined_call_operand.hbm [shape: bf16[128,128], index: 4, kind: input, shape index: {}]
  %s5 = inlined_call_operand.vmem [shape: f32[1,128], index: 5, kind: input, shape index: {}]
  %s6 = inlined_call_operand.hbm [shape: bf16[128,128], index: 6, kind: input, shape index: {}]
  %s7 = inlined_call_operand.vmem [shape: f32[1,128], index: 7, kind: input, shape index: {}]
  %s8 = inlined_call_operand.hbm [shape: bf16[128,128], index: 8, kind: input, shape index: {}]
  %s9 = inlined_call_operand.vmem [shape: f32[1,128], index: 9, kind: input, shape index: {}]
  %s10 = inlined_call_operand.hbm [shape: f32[8,128], index: 10, kind: output, shape index: {}]
  %s11 = sld [smem:[#allocation0]]
  $region74: #{tpu_custom_call.1} parent=0
    _
  %s13 = ssub.s32 1, %s11
  %s14 = scalar_select 0, %s13, %s11
  $region1: #{tpu_custom_call.1} parent=0
    #allocation2 [shape = 'u8[512]{0}', space=smem, size = 0x200, scoped, tag = 'input window, operand 0, single buffered']
    #allocation3 [shape = 's32[1]{0}', space=sflag, size = 0x4, scoped, tag = 'scoped memory for tpu_custom_call.1']
    #allocation4 [shape = 's32[1]{0}', space=sflag, size = 0x4, scoped, tag = 'scoped memory for tpu_custom_call.1']
    #allocation5 [shape = 's32[1]{0}', space=sflag, size = 0x4, scoped, tag = 'scoped memory for tpu_custom_call.1']
    #allocation6 [shape = 'u8[2048]{0}', space=vmem, size = 0x800, scoped, tag = 'input window, operand 1, single buffered']
    #allocation7 [shape = 'u8[32768]{0}', space=vmem, size = 0x8000, scoped, tag = 'input window, operand 2, single buffered']
    #allocation8 [shape = 's32[1]{0}', space=sflag, size = 0x4, scoped, tag = 'scoped memory for tpu_custom_call.1']
    #allocation9 [shape = 'u8[32768]{0}', space=vmem, size = 0x8000, scoped, tag = 'input window, operand 4, single buffered']
    #allocation10 [shape = 'u8[32768]{0}', space=vmem, size = 0x8000, scoped, tag = 'input window, operand 6, single buffered']
    #allocation11 [shape = 's32[1]{0}', space=sflag, size = 0x4, scoped, tag = 'scoped memory for tpu_custom_call.1']
    #allocation12 [shape = 'u8[32768]{0}', space=vmem, size = 0x8000, scoped, tag = 'input window, operand 8, single buffered']
    #allocation13 [shape = 'u8[4096]{0}', space=vmem, size = 0x1000, scoped, tag = 'output window, operand 0, single buffered']
    %15 = vsyncpa [#allocation5], 0
    %16 = vsyncpa [#allocation3], 0
    %17 = vsyncpa [#allocation8], 0
    %18 = vsyncpa [#allocation11], 0
    %19 = vsyncpa [#allocation4], 0
    // Predicated region
    $region2: #{tpu_custom_call.1} parent=1 // pred_check
      _
    $region3: #{tpu_custom_call.1} parent=1 // pred_check_branch
      %21 = sbr.rel (0) target = $region5
    $region4: #{tpu_custom_call.1} parent=1 // pred_region
      %s23 = ssub.s32 16, 16
      %24 = vsyncadd [#allocation5], %s23
      %27 = dma.hbm_to_smem %s0, 16, [#allocation2], [#allocation5]
    $region5: #{tpu_custom_call.1} parent=1 // pred_fallthru
      _
    // Predicated region
    $region6: #{tpu_custom_call.1} parent=1 // pred_check
      _
    $region7: #{tpu_custom_call.1} parent=1 // pred_check_branch
      %29 = sbr.rel (0) target = $region9
    $region8: #{tpu_custom_call.1} parent=1 // pred_region
      %s31 = ssub.s32 64, 64
      %32 = vsyncadd [#allocation3], %s31
      %s34 = sshll.u32 [#allocation6], 4
      %s35 = int_to_ptr.vmem [resolvable:$true] %s34
      %37 = dma.hbm_to_vmem [thread:$0]  %s1, 64, %s35, [#allocation3]
    $region9: #{tpu_custom_call.1} parent=1 // pred_fallthru
      _
    // Predicated region
    $region10: #{tpu_custom_call.1} parent=1 // pred_check
      _
    $region11: #{tpu_custom_call.1} parent=1 // pred_check_branch
      %39 = sbr.rel (0) target = $region13
    $region12: #{tpu_custom_call.1} parent=1 // pred_region
      %s41 = ssub.s32 1024, 1024
      %42 = vsyncadd [#allocation8], %s41
      %s43 = sshll.u32 [#allocation7], 4
      %s44 = int_to_ptr.vmem [resolvable:$true] %s43
      %49 = dma.hbm_to_vmem [thread:$0]  %s2, 1024, %s44, [#allocation8], 64, 64, 4
    $region13: #{tpu_custom_call.1} parent=1 // pred_fallthru
      _
    // Predicated region
    $region14: #{tpu_custom_call.1} parent=1 // pred_check
      _
    $region15: #{tpu_custom_call.1} parent=1 // pred_check_branch
      %51 = sbr.rel (0) target = $region17
    $region16: #{tpu_custom_call.1} parent=1 // pred_region
      _
    $region17: #{tpu_custom_call.1} parent=1 // pred_fallthru
      _
    // Predicated region
    $region18: #{tpu_custom_call.1} parent=1 // pred_check
      _
    $region19: #{tpu_custom_call.1} parent=1 // pred_check_branch
      %53 = sbr.rel (0) target = $region21
    $region20: #{tpu_custom_call.1} parent=1 // pred_region
      %s55 = ssub.s32 1024, 1024
      %56 = vsyncadd [#allocation8], %s55
      %s57 = sshll.u32 [#allocation9], 4
      %s58 = int_to_ptr.vmem [resolvable:$true] %s57
      %63 = dma.hbm_to_vmem [thread:$0]  %s4, 1024, %s58, [#allocation8], 64, 64, 4
    $region21: #{tpu_custom_call.1} parent=1 // pred_fallthru
      _
    // Predicated region
    $region22: #{tpu_custom_call.1} parent=1 // pred_check
      _
    $region23: #{tpu_custom_call.1} parent=1 // pred_check_branch
      %65 = sbr.rel (0) target = $region25
    $region24: #{tpu_custom_call.1} parent=1 // pred_region
      _
    $region25: #{tpu_custom_call.1} parent=1 // pred_fallthru
      _
    // Predicated region
    $region26: #{tpu_custom_call.1} parent=1 // pred_check
      _
    $region27: #{tpu_custom_call.1} parent=1 // pred_check_branch
      %67 = sbr.rel (0) target = $region29
    $region28: #{tpu_custom_call.1} parent=1 // pred_region
      %s69 = ssub.s32 1024, 1024
      %70 = vsyncadd [#allocation11], %s69
      %s71 = sshll.u32 [#allocation10], 4
      %s72 = int_to_ptr.vmem [resolvable:$true] %s71
      %77 = dma.hbm_to_vmem [thread:$0]  %s6, 1024, %s72, [#allocation11], 64, 64, 4
    $region29: #{tpu_custom_call.1} parent=1 // pred_fallthru
      _
    // Predicated region
    $region30: #{tpu_custom_call.1} parent=1 // pred_check
      _
    $region31: #{tpu_custom_call.1} parent=1 // pred_check_branch
      %79 = sbr.rel (0) target = $region33
    $region32: #{tpu_custom_call.1} parent=1 // pred_region
      _
    $region33: #{tpu_custom_call.1} parent=1 // pred_fallthru
      _
    // Predicated region
    $region34: #{tpu_custom_call.1} parent=1 // pred_check
      _
    $region35: #{tpu_custom_call.1} parent=1 // pred_check_branch
      %81 = sbr.rel (0) target = $region37
    $region36: #{tpu_custom_call.1} parent=1 // pred_region
      %s83 = ssub.s32 1024, 1024
      %84 = vsyncadd [#allocation11], %s83
      %s85 = sshll.u32 [#allocation12], 4
      %s86 = int_to_ptr.vmem [resolvable:$true] %s85
      %91 = dma.hbm_to_vmem [thread:$0]  %s8, 1024, %s86, [#allocation11], 64, 64, 4
    $region37: #{tpu_custom_call.1} parent=1 // pred_fallthru
      _
    // Predicated region
    $region38: #{tpu_custom_call.1} parent=1 // pred_check
      _
    $region39: #{tpu_custom_call.1} parent=1 // pred_check_branch
      %93 = sbr.rel (0) target = $region41
    $region40: #{tpu_custom_call.1} parent=1 // pred_region
      _
    $region41: #{tpu_custom_call.1} parent=1 // pred_fallthru
      _
    // Predicated region
    $region42: #{tpu_custom_call.1} parent=1 // pred_check
      _
    $region43: #{tpu_custom_call.1} parent=1 // pred_check_branch
      %95 = sbr.rel (0) target = $region45
    $region44: #{tpu_custom_call.1} parent=1 // pred_region
      %96 = dma.done [#allocation5], 16
    $region45: #{tpu_custom_call.1} parent=1 // pred_fallthru
      _
    // Predicated region
    $region46: #{tpu_custom_call.1} parent=1 // pred_check
      _
    $region47: #{tpu_custom_call.1} parent=1 // pred_check_branch
      %98 = sbr.rel (0) target = $region49
    $region48: #{tpu_custom_call.1} parent=1 // pred_region
      %99 = dma.done [#allocation3], 64
    $region49: #{tpu_custom_call.1} parent=1 // pred_fallthru
      _
    // Predicated region
    $region50: #{tpu_custom_call.1} parent=1 // pred_check
      _
    $region51: #{tpu_custom_call.1} parent=1 // pred_check_branch
      %101 = sbr.rel (0) target = $region53
    $region52: #{tpu_custom_call.1} parent=1 // pred_region
      %102 = dma.done [#allocation8], 1024
    $region53: #{tpu_custom_call.1} parent=1 // pred_fallthru
      _
    // Predicated region
    $region54: #{tpu_custom_call.1} parent=1 // pred_check
      _
    $region55: #{tpu_custom_call.1} parent=1 // pred_check_branch
      %104 = sbr.rel (0) target = $region57
    $region56: #{tpu_custom_call.1} parent=1 // pred_region
      %105 = dma.done [#allocation8], 1024
    $region57: #{tpu_custom_call.1} parent=1 // pred_fallthru
      _
    // Predicated region
    $region58: #{tpu_custom_call.1} parent=1 // pred_check
      _
    $region59: #{tpu_custom_call.1} parent=1 // pred_check_branch
      %107 = sbr.rel (0) target = $region61
    $region60: #{tpu_custom_call.1} parent=1 // pred_region
      %108 = dma.done [#allocation11], 1024
    $region61: #{tpu_custom_call.1} parent=1 // pred_fallthru
      _
    // Predicated region
    $region62: #{tpu_custom_call.1} parent=1 // pred_check
      _
    $region63: #{tpu_custom_call.1} parent=1 // pred_check_branch
      %110 = sbr.rel (0) target = $region65
    $region64: #{tpu_custom_call.1} parent=1 // pred_region
      %111 = dma.done [#allocation11], 1024
    $region65: #{tpu_custom_call.1} parent=1 // pred_fallthru
      _
    %112 = sfence
    %v114 = vld [vmem:[#allocation6] sm:$0xf]
    %v115 = vld [vmem:[#allocation12] sm:$0xf]
    %v116 = vld [vmem:[#allocation12 + $0x4] sm:$0xf]
    %v117 = vld [vmem:[#allocation12 + $0x8] sm:$0xf]
    %v118 = vld [vmem:[#allocation12 + $0xc] sm:$0xf]
    %v119 = vld [vmem:[#allocation12 + $0x10] sm:$0xf]
    %v120 = vld [vmem:[#allocation12 + $0x14] sm:$0xf]
    %v121 = vld [vmem:[#allocation12 + $0x18] sm:$0xf]
    %v122 = vld [vmem:[#allocation12 + $0x1c] sm:$0xf]
    %v123 = vld [vmem:[#allocation12 + $0x20] sm:$0xf]
    %v124 = vld [vmem:[#allocation12 + $0x24] sm:$0xf]
    %v125 = vld [vmem:[#allocation12 + $0x28] sm:$0xf]
    %v126 = vld [vmem:[#allocation12 + $0x2c] sm:$0xf]
    %v127 = vld [vmem:[#allocation12 + $0x30] sm:$0xf]
    %v128 = vld [vmem:[#allocation12 + $0x34] sm:$0xf]
    %v129 = vld [vmem:[#allocation12 + $0x38] sm:$0xf]
    %v130 = vld [vmem:[#allocation12 + $0x3c] sm:$0xf]
    %v131 = vld [vmem:[%s9] sm:$0x1]
    %v133 = vlaneseq
    %v134 = vshrl.u32 %v133, 7
    %v135 = vsub.s32 0, %v134
    %v136 = vrot.slane %v131, %v135
    %v154 = vunpack.c.l.b16 %v115
    %v155 = vunpack.c.l.b16 %v116
    %v156 = vunpack.c.l.b16 %v117
    %v157 = vunpack.c.l.b16 %v118
    %v158 = vunpack.c.l.b16 %v119
    %v159 = vunpack.c.l.b16 %v120
    %v160 = vunpack.c.l.b16 %v121
    %v161 = vunpack.c.l.b16 %v122
    %v162 = vunpack.c.l.b16 %v123
    %v163 = vunpack.c.l.b16 %v124
    %v164 = vunpack.c.l.b16 %v125
    %v165 = vunpack.c.l.b16 %v126
    %v166 = vunpack.c.l.b16 %v127
    %v167 = vunpack.c.l.b16 %v128
    %v168 = vunpack.c.l.b16 %v129
    %v169 = vunpack.c.l.b16 %v130
    %v170 = vpack.c.b16 %v155, %v154
    %v171 = vpack.c.b16 %v157, %v156
    %v172 = vpack.c.b16 %v159, %v158
    %v173 = vpack.c.b16 %v161, %v160
    %v174 = vpack.c.b16 %v163, %v162
    %v175 = vpack.c.b16 %v165, %v164
    %v176 = vpack.c.b16 %v167, %v166
    %v177 = vpack.c.b16 %v169, %v168
    %186 = vmatprep.subr.bf16.mxu0 0
    %187 = vmatpush1.bf16.msra.mxu0 %v170
    %188 = vmatprep.subr.bf16.mxu0 0
    %189 = vmatpush1.bf16.msra.mxu0 %v171
    %190 = vmatprep.subr.bf16.mxu0 0
    %191 = vmatpush1.bf16.msra.mxu0 %v172
    %192 = vmatprep.subr.bf16.mxu0 0
    %193 = vmatpush1.bf16.msra.mxu0 %v173
    %194 = vmatprep.subr.bf16.mxu0 0
    %195 = vmatpush1.bf16.msra.mxu0 %v174
    %196 = vmatprep.subr.bf16.mxu0 0
    %197 = vmatpush1.bf16.msra.mxu0 %v175
    %198 = vmatprep.subr.bf16.mxu0 0
    %199 = vmatpush1.bf16.msra.mxu0 %v176
    %200 = vmatprep.subr.bf16.mxu0 0
    %201 = vmatpush1.bf16.msra.mxu0 %v177
    %202 = vmatprep.subr.bf16.mxu0 0
    %203 = vmatpush1.bf16.msra.mxu0 0
    %204 = vmatprep.subr.bf16.mxu0 0
    %205 = vmatpush1.bf16.msra.mxu0 0
    %206 = vmatprep.subr.bf16.mxu0 0
    %207 = vmatpush1.bf16.msra.mxu0 0
    %208 = vmatprep.subr.bf16.mxu0 0
    %209 = vmatpush1.bf16.msra.mxu0 0
    %210 = vmatprep.subr.bf16.mxu0 0
    %211 = vmatpush1.bf16.msra.mxu0 0
    %212 = vmatprep.subr.bf16.mxu0 0
    %213 = vmatpush1.bf16.msra.mxu0 0
    %214 = vmatprep.subr.bf16.mxu0 0
    %215 = vmatpush1.bf16.msra.mxu0 0
    %216 = vmatprep.subr.bf16.mxu0 0
    %217 = vmatpush1.bf16.msra.mxu0 0
    %218 = vmatprep.mubr.bf16.mxu0 0
    %219 = vmatmul.mubr.bf16.gmra.mrb[0].mxu0 %v114
    %v220 = vpop.f32.mrb[0].mxu0
    %v221 = vadd.f32 %v136, %v220
    %v222 = vpop.f32.mrb[0].mxu0
    %v223 = vpop.f32.mrb[0].mxu0
    %v224 = vpop.f32.mrb[0].mxu0
    %225 = vdwg.mxu0
    %v226 = vld [vmem:[#allocation7] sm:$0xf]
    %v227 = vld [vmem:[#allocation7 + $0x4] sm:$0xf]
    %v228 = vld [vmem:[#allocation7 + $0x8] sm:$0xf]
    %v229 = vld [vmem:[#allocation7 + $0xc] sm:$0xf]
    %v230 = vld [vmem:[#allocation7 + $0x10] sm:$0xf]
    %v231 = vld [vmem:[#allocation7 + $0x14] sm:$0xf]
    %v232 = vld [vmem:[#allocation7 + $0x18] sm:$0xf]
    %v233 = vld [vmem:[#allocation7 + $0x1c] sm:$0xf]
    %v234 = vld [vmem:[#allocation7 + $0x20] sm:$0xf]
    %v235 = vld [vmem:[#allocation7 + $0x24] sm:$0xf]
    %v236 = vld [vmem:[#allocation7 + $0x28] sm:$0xf]
    %v237 = vld [vmem:[#allocation7 + $0x2c] sm:$0xf]
    %v238 = vld [vmem:[#allocation7 + $0x30] sm:$0xf]
    %v239 = vld [vmem:[#allocation7 + $0x34] sm:$0xf]
    %v240 = vld [vmem:[#allocation7 + $0x38] sm:$0xf]
    %v241 = vld [vmem:[#allocation7 + $0x3c] sm:$0xf]
    %v242 = vld [vmem:[%s3] sm:$0x1]
    %v244 = vlaneseq
    %v245 = vshrl.u32 %v244, 7
    %v246 = vsub.s32 0, %v245
    %v247 = vrot.slane %v242, %v246
    %v265 = vunpack.c.l.b16 %v226
    %v266 = vunpack.c.l.b16 %v227
    %v267 = vunpack.c.l.b16 %v228
    %v268 = vunpack.c.l.b16 %v229
    %v269 = vunpack.c.l.b16 %v230
    %v270 = vunpack.c.l.b16 %v231
    %v271 = vunpack.c.l.b16 %v232
    %v272 = vunpack.c.l.b16 %v233
    %v273 = vunpack.c.l.b16 %v234
    %v274 = vunpack.c.l.b16 %v235
    %v275 = vunpack.c.l.b16 %v236
    %v276 = vunpack.c.l.b16 %v237
    %v277 = vunpack.c.l.b16 %v238
    %v278 = vunpack.c.l.b16 %v239
    %v279 = vunpack.c.l.b16 %v240
    %v280 = vunpack.c.l.b16 %v241
    %v281 = vpack.c.b16 %v266, %v265
    %v282 = vpack.c.b16 %v268, %v267
    %v283 = vpack.c.b16 %v270, %v269
    %v284 = vpack.c.b16 %v272, %v271
    %v285 = vpack.c.b16 %v274, %v273
    %v286 = vpack.c.b16 %v276, %v275
    %v287 = vpack.c.b16 %v278, %v277
    %v288 = vpack.c.b16 %v280, %v279
    %297 = vmatprep.subr.bf16.mxu0 0
    %298 = vmatpush1.bf16.msra.mxu0 %v281
    %299 = vmatprep.subr.bf16.mxu0 0
    %300 = vmatpush1.bf16.msra.mxu0 %v282
    %301 = vmatprep.subr.bf16.mxu0 0
    %302 = vmatpush1.bf16.msra.mxu0 %v283
    %303 = vmatprep.subr.bf16.mxu0 0
    %304 = vmatpush1.bf16.msra.mxu0 %v284
    %305 = vmatprep.subr.bf16.mxu0 0
    %306 = vmatpush1.bf16.msra.mxu0 %v285
    %307 = vmatprep.subr.bf16.mxu0 0
    %308 = vmatpush1.bf16.msra.mxu0 %v286
    %309 = vmatprep.subr.bf16.mxu0 0
    %310 = vmatpush1.bf16.msra.mxu0 %v287
    %311 = vmatprep.subr.bf16.mxu0 0
    %312 = vmatpush1.bf16.msra.mxu0 %v288
    %313 = vmatprep.subr.bf16.mxu0 0
    %314 = vmatpush1.bf16.msra.mxu0 0
    %315 = vmatprep.subr.bf16.mxu0 0
    %316 = vmatpush1.bf16.msra.mxu0 0
    %317 = vmatprep.subr.bf16.mxu0 0
    %318 = vmatpush1.bf16.msra.mxu0 0
    %319 = vmatprep.subr.bf16.mxu0 0
    %320 = vmatpush1.bf16.msra.mxu0 0
    %321 = vmatprep.subr.bf16.mxu0 0
    %322 = vmatpush1.bf16.msra.mxu0 0
    %323 = vmatprep.subr.bf16.mxu0 0
    %324 = vmatpush1.bf16.msra.mxu0 0
    %325 = vmatprep.subr.bf16.mxu0 0
    %326 = vmatpush1.bf16.msra.mxu0 0
    %327 = vmatprep.subr.bf16.mxu0 0
    %328 = vmatpush1.bf16.msra.mxu0 0
    %329 = vmatprep.mubr.bf16.mxu0 0
    %330 = vmatmul.mubr.bf16.gmra.mrb[0].mxu0 %v114
    %v331 = vpop.f32.mrb[0].mxu0
    %v332 = vadd.f32 %v247, %v331
    %v333 = vpop.f32.mrb[0].mxu0
    %v334 = vpop.f32.mrb[0].mxu0
    %v335 = vpop.f32.mrb[0].mxu0
    %336 = vdwg.mxu0
    %vm337 = vcmp.gt.f32.partialorder %v332, 0.0
    %s338 = sld [smem:[#allocation2]]
    %v339 = vstv %s338
    %v340 = vmul.f32 %v339, %v332
    %v341 = vsel %vm337, %v332, %v340
    %v342 = vpack.c.bf16 %v341, %v341
    %v343 = vld [vmem:[#allocation9] sm:$0xf]
    %v344 = vld [vmem:[#allocation9 + $0x4] sm:$0xf]
    %v345 = vld [vmem:[#allocation9 + $0x8] sm:$0xf]
    %v346 = vld [vmem:[#allocation9 + $0xc] sm:$0xf]
    %v347 = vld [vmem:[#allocation9 + $0x10] sm:$0xf]
    %v348 = vld [vmem:[#allocation9 + $0x14] sm:$0xf]
    %v349 = vld [vmem:[#allocation9 + $0x18] sm:$0xf]
    %v350 = vld [vmem:[#allocation9 + $0x1c] sm:$0xf]
    %v351 = vld [vmem:[#allocation9 + $0x20] sm:$0xf]
    %v352 = vld [vmem:[#allocation9 + $0x24] sm:$0xf]
    %v353 = vld [vmem:[#allocation9 + $0x28] sm:$0xf]
    %v354 = vld [vmem:[#allocation9 + $0x2c] sm:$0xf]
    %v355 = vld [vmem:[#allocation9 + $0x30] sm:$0xf]
    %v356 = vld [vmem:[#allocation9 + $0x34] sm:$0xf]
    %v357 = vld [vmem:[#allocation9 + $0x38] sm:$0xf]
    %v358 = vld [vmem:[#allocation9 + $0x3c] sm:$0xf]
    %v359 = vld [vmem:[%s5] sm:$0x1]
    %v361 = vlaneseq
    %v362 = vshrl.u32 %v361, 7
    %v363 = vsub.s32 0, %v362
    %v364 = vrot.slane %v359, %v363
    %v382 = vunpack.c.l.b16 %v343
    %v383 = vunpack.c.l.b16 %v344
    %v384 = vunpack.c.l.b16 %v345
    %v385 = vunpack.c.l.b16 %v346
    %v386 = vunpack.c.l.b16 %v347
    %v387 = vunpack.c.l.b16 %v348
    %v388 = vunpack.c.l.b16 %v349
    %v389 = vunpack.c.l.b16 %v350
    %v390 = vunpack.c.l.b16 %v351
    %v391 = vunpack.c.l.b16 %v352
    %v392 = vunpack.c.l.b16 %v353
    %v393 = vunpack.c.l.b16 %v354
    %v394 = vunpack.c.l.b16 %v355
    %v395 = vunpack.c.l.b16 %v356
    %v396 = vunpack.c.l.b16 %v357
    %v397 = vunpack.c.l.b16 %v358
    %v398 = vpack.c.b16 %v383, %v382
    %v399 = vpack.c.b16 %v385, %v384
    %v400 = vpack.c.b16 %v387, %v386
    %v401 = vpack.c.b16 %v389, %v388
    %v402 = vpack.c.b16 %v391, %v390
    %v403 = vpack.c.b16 %v393, %v392
    %v404 = vpack.c.b16 %v395, %v394
    %v405 = vpack.c.b16 %v397, %v396
    %414 = vmatprep.subr.bf16.mxu0 0
    %415 = vmatpush1.bf16.msra.mxu0 %v398
    %416 = vmatprep.subr.bf16.mxu0 0
    %417 = vmatpush1.bf16.msra.mxu0 %v399
    %418 = vmatprep.subr.bf16.mxu0 0
    %419 = vmatpush1.bf16.msra.mxu0 %v400
    %420 = vmatprep.subr.bf16.mxu0 0
    %421 = vmatpush1.bf16.msra.mxu0 %v401
    %422 = vmatprep.subr.bf16.mxu0 0
    %423 = vmatpush1.bf16.msra.mxu0 %v402
    %424 = vmatprep.subr.bf16.mxu0 0
    %425 = vmatpush1.bf16.msra.mxu0 %v403
    %426 = vmatprep.subr.bf16.mxu0 0
    %427 = vmatpush1.bf16.msra.mxu0 %v404
    %428 = vmatprep.subr.bf16.mxu0 0
    %429 = vmatpush1.bf16.msra.mxu0 %v405
    %430 = vmatprep.subr.bf16.mxu0 0
    %431 = vmatpush1.bf16.msra.mxu0 0
    %432 = vmatprep.subr.bf16.mxu0 0
    %433 = vmatpush1.bf16.msra.mxu0 0
    %434 = vmatprep.subr.bf16.mxu0 0
    %435 = vmatpush1.bf16.msra.mxu0 0
    %436 = vmatprep.subr.bf16.mxu0 0
    %437 = vmatpush1.bf16.msra.mxu0 0
    %438 = vmatprep.subr.bf16.mxu0 0
    %439 = vmatpush1.bf16.msra.mxu0 0
    %440 = vmatprep.subr.bf16.mxu0 0
    %441 = vmatpush1.bf16.msra.mxu0 0
    %442 = vmatprep.subr.bf16.mxu0 0
    %443 = vmatpush1.bf16.msra.mxu0 0
    %444 = vmatprep.subr.bf16.mxu0 0
    %445 = vmatpush1.bf16.msra.mxu0 0
    %446 = vmatprep.mubr.bf16.mxu0 0
    %447 = vmatmul.mubr.bf16.gmra.mrb[0].mxu0 %v342
    %v448 = vpop.f32.mrb[0].mxu0
    %v449 = vadd.f32 %v364, %v448
    %v450 = vpop.f32.mrb[0].mxu0
    %v451 = vpop.f32.mrb[0].mxu0
    %v452 = vpop.f32.mrb[0].mxu0
    %453 = vdwg.mxu0
    %vm454 = vcmp.gt.f32.partialorder %v449, 0.0
    %s455 = sld [smem:[#allocation2 + $0x1]]
    %v456 = vstv %s455
    %v457 = vmul.f32 %v456, %v449
    %v458 = vsel %vm454, %v449, %v457
    %v459 = vpack.c.bf16 %v458, %v458
    %v460 = vld [vmem:[#allocation10] sm:$0xf]
    %v461 = vld [vmem:[#allocation10 + $0x4] sm:$0xf]
    %v462 = vld [vmem:[#allocation10 + $0x8] sm:$0xf]
    %v463 = vld [vmem:[#allocation10 + $0xc] sm:$0xf]
    %v464 = vld [vmem:[#allocation10 + $0x10] sm:$0xf]
    %v465 = vld [vmem:[#allocation10 + $0x14] sm:$0xf]
    %v466 = vld [vmem:[#allocation10 + $0x18] sm:$0xf]
    %v467 = vld [vmem:[#allocation10 + $0x1c] sm:$0xf]
    %v468 = vld [vmem:[#allocation10 + $0x20] sm:$0xf]
    %v469 = vld [vmem:[#allocation10 + $0x24] sm:$0xf]
    %v470 = vld [vmem:[#allocation10 + $0x28] sm:$0xf]
    %v471 = vld [vmem:[#allocation10 + $0x2c] sm:$0xf]
    %v472 = vld [vmem:[#allocation10 + $0x30] sm:$0xf]
    %v473 = vld [vmem:[#allocation10 + $0x34] sm:$0xf]
    %v474 = vld [vmem:[#allocation10 + $0x38] sm:$0xf]
    %v475 = vld [vmem:[#allocation10 + $0x3c] sm:$0xf]
    %v476 = vld [vmem:[%s7] sm:$0x1]
    %v478 = vlaneseq
    %v479 = vshrl.u32 %v478, 7
    %v480 = vsub.s32 0, %v479
    %v481 = vrot.slane %v476, %v480
    %v499 = vunpack.c.l.b16 %v460
    %v500 = vunpack.c.l.b16 %v461
    %v501 = vunpack.c.l.b16 %v462
    %v502 = vunpack.c.l.b16 %v463
    %v503 = vunpack.c.l.b16 %v464
    %v504 = vunpack.c.l.b16 %v465
    %v505 = vunpack.c.l.b16 %v466
    %v506 = vunpack.c.l.b16 %v467
    %v507 = vunpack.c.l.b16 %v468
    %v508 = vunpack.c.l.b16 %v469
    %v509 = vunpack.c.l.b16 %v470
    %v510 = vunpack.c.l.b16 %v471
    %v511 = vunpack.c.l.b16 %v472
    %v512 = vunpack.c.l.b16 %v473
    %v513 = vunpack.c.l.b16 %v474
    %v514 = vunpack.c.l.b16 %v475
    %v515 = vpack.c.b16 %v500, %v499
    %v516 = vpack.c.b16 %v502, %v501
    %v517 = vpack.c.b16 %v504, %v503
    %v518 = vpack.c.b16 %v506, %v505
    %v519 = vpack.c.b16 %v508, %v507
    %v520 = vpack.c.b16 %v510, %v509
    %v521 = vpack.c.b16 %v512, %v511
    %v522 = vpack.c.b16 %v514, %v513
    %531 = vmatprep.subr.bf16.mxu0 0
    %532 = vmatpush1.bf16.msra.mxu0 %v515
    %533 = vmatprep.subr.bf16.mxu0 0
    %534 = vmatpush1.bf16.msra.mxu0 %v516
    %535 = vmatprep.subr.bf16.mxu0 0
    %536 = vmatpush1.bf16.msra.mxu0 %v517
    %537 = vmatprep.subr.bf16.mxu0 0
    %538 = vmatpush1.bf16.msra.mxu0 %v518
    %539 = vmatprep.subr.bf16.mxu0 0
    %540 = vmatpush1.bf16.msra.mxu0 %v519
    %541 = vmatprep.subr.bf16.mxu0 0
    %542 = vmatpush1.bf16.msra.mxu0 %v520
    %543 = vmatprep.subr.bf16.mxu0 0
    %544 = vmatpush1.bf16.msra.mxu0 %v521
    %545 = vmatprep.subr.bf16.mxu0 0
    %546 = vmatpush1.bf16.msra.mxu0 %v522
    %547 = vmatprep.subr.bf16.mxu0 0
    %548 = vmatpush1.bf16.msra.mxu0 0
    %549 = vmatprep.subr.bf16.mxu0 0
    %550 = vmatpush1.bf16.msra.mxu0 0
    %551 = vmatprep.subr.bf16.mxu0 0
    %552 = vmatpush1.bf16.msra.mxu0 0
    %553 = vmatprep.subr.bf16.mxu0 0
    %554 = vmatpush1.bf16.msra.mxu0 0
    %555 = vmatprep.subr.bf16.mxu0 0
    %556 = vmatpush1.bf16.msra.mxu0 0
    %557 = vmatprep.subr.bf16.mxu0 0
    %558 = vmatpush1.bf16.msra.mxu0 0
    %559 = vmatprep.subr.bf16.mxu0 0
    %560 = vmatpush1.bf16.msra.mxu0 0
    %561 = vmatprep.subr.bf16.mxu0 0
    %562 = vmatpush1.bf16.msra.mxu0 0
    %563 = vmatprep.mubr.bf16.mxu0 0
    %564 = vmatmul.mubr.bf16.gmra.mrb[0].mxu0 %v459
    %v565 = vpop.f32.mrb[0].mxu0
    %v566 = vadd.f32 %v481, %v565
    %v567 = vpop.f32.mrb[0].mxu0
    %v568 = vpop.f32.mrb[0].mxu0
    %v569 = vpop.f32.mrb[0].mxu0
    %570 = vdwg.mxu0
    %vm571 = vcmp.gt.f32.partialorder %v566, 0.0
    %s572 = sld [smem:[#allocation2 + $0x2]]
    %v573 = vstv %s572
    %v574 = vmul.f32 %v573, %v566
    %v575 = vsel %vm571, %v566, %v574
    %v576 = vadd.f32 %v575, %v221
    %577 = vst [vmem:[#allocation13] sm:$0xff] %v576
    // Predicated region
    $region66: #{tpu_custom_call.1} parent=1 // pred_check
      _
    $region67: #{tpu_custom_call.1} parent=1 // pred_check_branch
      %579 = sbr.rel (0) target = $region69
    $region68: #{tpu_custom_call.1} parent=1 // pred_region
      %s581 = ssub.s32 128, 128
      %582 = vsyncadd [#allocation4], %s581
      %s584 = sshll.u32 [#allocation13], 4
      %s585 = int_to_ptr.vmem [resolvable:$true] %s584
      %587 = dma.vmem_to_hbm [thread:$0]  %s585, 128, %s10, [#allocation4]
    $region69: #{tpu_custom_call.1} parent=1 // pred_fallthru
      _
    // Predicated region
    $region70: #{tpu_custom_call.1} parent=1 // pred_check
      _
    $region71: #{tpu_custom_call.1} parent=1 // pred_check_branch
      %589 = sbr.rel (0) target = $region73
    $region72: #{tpu_custom_call.1} parent=1 // pred_region
      %590 = dma.done [#allocation4], 128
    $region73: #{tpu_custom_call.1} parent=1 // pred_fallthru
      _
    %591 = vsyncpa [#allocation3], 1
    %592 = vsyncpa [#allocation8], 1
    %593 = vsyncpa [#allocation11], 1
    %594 = vsyncpa [#allocation4], 1
    %595 = vsyncpa [#allocation5], 1

</llo_original>
